<compile_context>
chip_gen: v5e
topology: v5e:2x2
jax: 0.10.0
libtpu: 0.0.40
codegen_flags: <defaults>
</compile_context>

<pallas_src>
import functools

import jax
import jax.numpy as jnp
from jax.experimental import pallas as pl
from jax.experimental.pallas import tpu as pltpu

_SUB = 8                # sublane tile
_LANE = 128             # lane tile
_MAX_TILE_ROWS = 8192   # 8192 x 128 x 4B = 4 MiB per f32 input block


def _bce_logits_sum_kernel(x_ref, y_ref, o_ref, *, n_valid, tile_rows,
                           steps_per_core):
    """Accumulates element-wise BCE-with-logits loss into an (8,128) block.

    Grid is (ncores, steps_per_core). The output block index depends only on
    the (parallel) core axis, so it stays resident in VMEM across the
    reduction axis and acts as a per-core vreg-shaped accumulator. Works for
    both the 2-D (small) and 1-D (large, no-pad) streaming layouts: the block
    is reshaped to (tile_rows, 128), which is a layout-preserving no-op.
    """
    c = pl.program_id(0)
    i = pl.program_id(1)

    @pl.when(i == 0)
    def _():
        o_ref[...] = jnp.zeros_like(o_ref)

    x = x_ref[...].astype(jnp.float32).reshape(tile_rows, _LANE)
    y = y_ref[...].astype(jnp.float32).reshape(tile_rows, _LANE)

    # numerically stable BCE-with-logits (same formula PyTorch uses):
    #   max(x, 0) - x*y + log(1 + exp(-|x|));  -|x| computed once.
    neg_abs_x = -jnp.abs(x)
    loss = jnp.maximum(x, 0.0) - x * y + jnp.log1p(jnp.exp(neg_abs_x))

    # Mask the ragged tail of the flattened input. Indices are derived from
    # the grid position (not the data), so whatever unspecified values sit in
    # the out-of-bounds tail of the last partial block contribute exactly 0.
    block_elems = tile_rows * _LANE
    start = (c * steps_per_core + i) * block_elems
    row = jax.lax.broadcasted_iota(jnp.int32, (tile_rows, _LANE), 0)
    lane = jax.lax.broadcasted_iota(jnp.int32, (tile_rows, _LANE), 1)
    idx = start + row * _LANE + lane
    loss = jnp.where(idx < n_valid, loss, 0.0)

    # Reduce (tile_rows, 128) -> (8, 128) with VPU adds only; the accumulator
    # stays vreg-shaped. The tiny cross-lane reduction happens in the wrapper.
    o_ref[...] += jnp.sum(loss.reshape(-1, _SUB, _LANE), axis=0)


def bce_with_logits_loss(logits, labels):
    """Mean-reduced BCEWithLogitsLoss computed with a Pallas TPU kernel."""
    assert logits.size == labels.size, (logits.shape, labels.shape)
    x = logits.reshape(-1)
    y = labels.reshape(-1)
    # Stream in the original floating dtype (cast to f32 happens in-kernel).
    if not jnp.issubdtype(x.dtype, jnp.floating):
        x = x.astype(jnp.float32)
    if not jnp.issubdtype(y.dtype, jnp.floating):
        y = y.astype(jnp.float32)
    n = x.shape[0]
    assert n > 0
    assert n < 2 ** 31  # in-kernel index arithmetic is int32

    rows8 = pl.cdiv(pl.cdiv(n, _LANE), _SUB) * _SUB  # logical 128-wide rows

    if rows8 <= _MAX_TILE_ROWS:
        # Small path: a single block covers everything. Pad only up to the
        # next (8,128) tile (< 1024 elements, on an array of <= 4 MiB) so the
        # 2-D view is exactly tiled; the in-kernel mask ignores the pad.
        ncores, steps_per_core, tile_rows = 1, 1, rows8
        pad = tile_rows * _LANE - n
        x_in = jnp.pad(x, (0, pad)).reshape(tile_rows, _LANE)
        y_in = jnp.pad(y, (0, pad)).reshape(tile_rows, _LANE)
        in_specs = [pl.BlockSpec((tile_rows, _LANE), lambda c, i: (0, 0))] * 2
    else:
        # Large path: stream the flat arrays directly (no padded copy), with
        # 1-D lane-dense blocks; the final partial block is masked in-kernel.
        # tile_rows is re-fit to the row count so over-read is only a few
        # rows. The leading size-2 axis shards rows across the 2 TensorCores
        # on v7x ("parallel" is the portable megacore mechanism); it is a
        # harmless serial loop on single-TC v5e/v6e.
        total_steps = pl.cdiv(rows8, _MAX_TILE_ROWS)
        ncores = 2
        steps_per_core = pl.cdiv(total_steps, ncores)
        tile_rows = pl.cdiv(pl.cdiv(rows8, ncores * steps_per_core), _SUB) * _SUB
        blk = tile_rows * _LANE

        def in_map(c, i):
            return (c * steps_per_core + i,)

        x_in, y_in = x, y
        in_specs = [pl.BlockSpec((blk,), in_map)] * 2

    kernel = functools.partial(
        _bce_logits_sum_kernel,
        n_valid=n, tile_rows=tile_rows, steps_per_core=steps_per_core)

    partial = pl.pallas_call(
        kernel,
        out_shape=jax.ShapeDtypeStruct((ncores * _SUB, _LANE), jnp.float32),
        grid_spec=pltpu.PrefetchScalarGridSpec(
            num_scalar_prefetch=0,
            grid=(ncores, steps_per_core),
            in_specs=in_specs,
            out_specs=pl.BlockSpec((_SUB, _LANE), lambda c, i: (c, 0)),
        ),
        compiler_params=pltpu.CompilerParams(
            dimension_semantics=("parallel", "arbitrary"),
            # 2 inputs x 2 pipeline buffers x 4 MiB (f32) = 16 MiB; state the
            # budget explicitly so v5e's 16 MiB default scoped limit is lifted
            # while staying safely under v7x's 64 MiB physical VMEM.
            vmem_limit_bytes=32 * 1024 * 1024,
        ),
    )(x_in, y_in)

    # Tiny epilogue: cross-lane sum of (ncores*8, 128) partials + divide by n.
    return jnp.sum(partial) / jnp.float32(n)


class BinaryCrossEntropyLoss:
    """JAX/Pallas port of the PyTorch module (with_logits=True path)."""

    def __init__(self, predictions_prefix, labels_prefix, with_logits=True,
                 output_prefix=None):
        self._pred_prefix = predictions_prefix
        self._labels_prefix = labels_prefix
        self._output_prefix = output_prefix
        if not with_logits:
            # TODO(synk): with_logits=False (nn.BCELoss on probabilities) not
            # implemented; refuse rather than silently using the logits path.
            raise NotImplementedError(
                "with_logits=False (nn.BCELoss) is not implemented")
        self._with_logits = with_logits

    def forward(self, inputs):
        all_logits = inputs[self._pred_prefix]
        all_labels = inputs[self._labels_prefix]
        assert all_logits.shape[0] == all_labels.shape[0]
        loss = bce_with_logits_loss(all_logits, all_labels)
        if self._output_prefix is not None:
            # PyTorch stores loss.cpu().item(); we store the device scalar and
            # let the caller pull it to host when it actually needs the value.
            inputs[self._output_prefix] = loss
        return loss

    __call__ = forward


def _reference(logits, labels):
    lf = logits.astype(jnp.float32)
    yf = labels.astype(jnp.float32)
    return jnp.mean(jnp.maximum(lf, 0.0) - lf * yf + jnp.log1p(jnp.exp(-jnp.abs(lf))))


if __name__ == "__main__":
    key = jax.random.PRNGKey(0)
    k1, k2, k3, k4, k5, k6 = jax.random.split(key, 6)

    # small synthetic batch: batch=8, 16 outputs per example
    logits = jax.random.normal(k1, (8, 16), dtype=jnp.float32)
    labels = (jax.random.uniform(k2, (8, 16)) > 0.5).astype(jnp.float32)

    module = BinaryCrossEntropyLoss(
        predictions_prefix="preds", labels_prefix="labels",
        with_logits=True, output_prefix="loss_out")
    inputs = {"preds": logits, "labels": labels}

    loss = jax.block_until_ready(module(inputs))
    ref = _reference(logits, labels)
    assert jnp.allclose(loss, ref, rtol=1e-5, atol=1e-6), (loss, ref)

    # medium check: ragged (not a multiple of 128) single-block path
    mid_logits = jax.random.normal(k3, (40, 7000), dtype=jnp.float32)
    mid_labels = (jax.random.uniform(k4, (40, 7000)) > 0.5).astype(jnp.float32)
    mid_loss = jax.block_until_ready(bce_with_logits_loss(mid_logits, mid_labels))
    mid_ref = _reference(mid_logits, mid_labels)
    assert jnp.allclose(mid_loss, mid_ref, rtol=1e-4, atol=1e-6), (mid_loss, mid_ref)

    # larger check: exercises the no-pad 1-D streaming path, the 2-way core
    # split and the masked partial tail block
    big_logits = jax.random.normal(k5, (1037, 1043), dtype=jnp.float32)
    big_labels = (jax.random.uniform(k6, (1037, 1043)) > 0.5).astype(jnp.float32)
    big_loss = jax.block_until_ready(bce_with_logits_loss(big_logits, big_labels))
    big_ref = _reference(big_logits, big_labels)
    assert jnp.allclose(big_loss, big_ref, rtol=1e-4, atol=1e-6), (big_loss, big_ref)

    print("KERNEL_OK")
</pallas_src>

<mosaic_0001>
module attributes {stable_mosaic.version = 11 : i64} {
  func.func @_bce_logits_sum_kernel(%arg0: i32, %arg1: i32, %arg2: memref<8x128xf32, #tpu.memory_space<vmem>>, %arg3: memref<8x128xf32, #tpu.memory_space<vmem>>, %arg4: memref<8x128xf32, #tpu.memory_space<vmem>>) attributes {dimension_semantics = [#tpu.dimension_semantics<parallel>, #tpu.dimension_semantics<arbitrary>], iteration_bounds = array<i64: 1, 1>, scalar_prefetch = 0 : i64, scratch_operands = 0 : i64, tpu.core_type = #tpu.core_type<tc>, window_params = [{pipeline_mode = #tpu.pipeline_mode<synchronous>, transform_indices = @transform_0, window_bounds = array<i64: 8, 128>}, {pipeline_mode = #tpu.pipeline_mode<synchronous>, transform_indices = @transform_1, window_bounds = array<i64: 8, 128>}, {transform_indices = @transform_2, window_bounds = array<i64: 8, 128>}]} {
    %c0_i32 = arith.constant 0 : i32
    %0 = arith.cmpi eq, %arg1, %c0_i32 : i32
    %1 = arith.extui %0 : i1 to i32
    %c0_i32_0 = arith.constant 0 : i32
    %2 = arith.cmpi ne, %1, %c0_i32_0 : i32
    scf.if %2 {
      %cst_12 = arith.constant 0.000000e+00 : f32
      %34 = vector.broadcast %cst_12 : f32 to vector<8x128xf32>
      %c0_13 = arith.constant 0 : index
      %c0_14 = arith.constant 0 : index
      %35 = vector.load %arg4[%c0_13, %c0_14] : memref<8x128xf32, #tpu.memory_space<vmem>>, vector<8x128xf32>
      tpu.vector_store %arg4[%c0_13, %c0_14], %34 {strides = array<i32>} : memref<8x128xf32, #tpu.memory_space<vmem>>, vector<8x128xf32>,
    } else {
    }
    %c0 = arith.constant 0 : index
    %c0_1 = arith.constant 0 : index
    %3 = vector.load %arg2[%c0, %c0_1] : memref<8x128xf32, #tpu.memory_space<vmem>>, vector<8x128xf32>
    %c0_2 = arith.constant 0 : index
    %c0_3 = arith.constant 0 : index
    %4 = vector.load %arg3[%c0_2, %c0_3] : memref<8x128xf32, #tpu.memory_space<vmem>>, vector<8x128xf32>
    %5 = math.absf %3 : vector<8x128xf32>
    %cst = arith.constant 0.000000e+00 : f32
    %6 = vector.broadcast %cst : f32 to vector<8x128xf32>
    %7 = arith.subf %6, %5 : vector<8x128xf32>
    %cst_4 = arith.constant 0.000000e+00 : f32
    %8 = vector.broadcast %cst_4 : f32 to vector<8x128xf32>
    %9 = arith.maximumf %3, %8 : vector<8x128xf32>
    %10 = arith.mulf %3, %4 : vector<8x128xf32>
    %11 = arith.subf %9, %10 : vector<8x128xf32>
    %12 = math.exp %7 : vector<8x128xf32>
    %13 = math.log1p %12 : vector<8x128xf32>
    %14 = arith.addf %11, %13 : vector<8x128xf32>
    %c1_i32 = arith.constant 1 : i32
    %15 = arith.muli %arg0, %c1_i32 : i32
    %16 = arith.addi %15, %arg1 : i32
    %c1024_i32 = arith.constant 1024 : i32
    %17 = arith.muli %16, %c1024_i32 : i32
    %18 = tpu.iota {dimensions = array<i32: 0>} : vector<8x128xi32>
    %19 = tpu.iota {dimensions = array<i32: 1>} : vector<8x128xi32>
    %c128_i32 = arith.constant 128 : i32
    %20 = vector.broadcast %c128_i32 : i32 to vector<8x128xi32>
    %21 = arith.muli %18, %20 : vector<8x128xi32>
    %22 = vector.broadcast %17 : i32 to vector<8x128xi32>
    %23 = arith.addi %22, %21 : vector<8x128xi32>
    %24 = arith.addi %23, %19 : vector<8x128xi32>
    %c128_i32_5 = arith.constant 128 : i32
    %25 = vector.broadcast %c128_i32_5 : i32 to vector<8x128xi32>
    %26 = arith.cmpi slt, %24, %25 : vector<8x128xi32>
    %cst_6 = arith.constant 0.000000e+00 : f32
    %27 = vector.broadcast %cst_6 : f32 to vector<8x128xf32>
    %28 = arith.select %26, %14, %27 : vector<8x128xi1>, vector<8x128xf32>
    %c0_7 = arith.constant 0 : index
    %c0_8 = arith.constant 0 : index
    %29 = vector.load %arg4[%c0_7, %c0_8] : memref<8x128xf32, #tpu.memory_space<vmem>>, vector<8x128xf32>
    %30 = vector.shape_cast %28 : vector<8x128xf32> to vector<1x8x128xf32>
    %cst_9 = arith.constant dense<0.000000e+00> : vector<8x128xf32>
    %31 = vector.multi_reduction <add>, %30, %cst_9 [0] : vector<1x8x128xf32> to vector<8x128xf32>
    %32 = arith.addf %29, %31 : vector<8x128xf32>
    %c0_10 = arith.constant 0 : index
    %c0_11 = arith.constant 0 : index
    %33 = vector.load %arg4[%c0_10, %c0_11] : memref<8x128xf32, #tpu.memory_space<vmem>>, vector<8x128xf32>
    tpu.vector_store %arg4[%c0_10, %c0_11], %32 {strides = array<i32>} : memref<8x128xf32, #tpu.memory_space<vmem>>, vector<8x128xf32>,
    return
  }
  func.func @transform_0(%arg0: i32, %arg1: i32) -> (i32, i32) {
    %c0_i32 = arith.constant 0 : i32
    %c0_i32_0 = arith.constant 0 : i32
    %c0_i32_1 = arith.constant 0 : i32
    return %c0_i32, %c0_i32_0 : i32, i32
  }
  func.func @transform_1(%arg0: i32, %arg1: i32) -> (i32, i32) {
    %c0_i32 = arith.constant 0 : i32
    %c0_i32_0 = arith.constant 0 : i32
    %c0_i32_1 = arith.constant 0 : i32
    return %c0_i32, %c0_i32_0 : i32, i32
  }
  func.func @transform_2(%arg0: i32, %arg1: i32) -> (i32, i32) {
    %c0_i32 = arith.constant 0 : i32
    %c0_i32_0 = arith.constant 0 : i32
    return %arg0, %c0_i32 : i32, i32
  }
}

</mosaic_0001>

<llo_original>
// kernel: tpu_custom_call.1
$region0: #{tpu_custom_call.1}
  #allocation0 [shape = 'u32[]', space=smem, size = 0x4, offset = 0x4, fixed_abs, tag = 'smem constant byte address 0x4 - core index']
  #allocation1 [shape = 'u32[72,128]{1,0:T(1,128)}', space=vmem, size = 0x9000, scoped, tag = 'internal scratch']
  %s0 = inlined_call_operand.hbm [shape: f32[8,128], index: 0, kind: input, shape index: {}]
  %s1 = inlined_call_operand.hbm [shape: f32[8,128], index: 1, kind: input, shape index: {}]
  %s2 = inlined_call_operand.hbm [shape: f32[8,128], index: 2, kind: output, shape index: {}]
  %s3 = sld [smem:[#allocation0]]
  $region30: #{tpu_custom_call.1} parent=0
    _
  %s5 = ssub.s32 1, %s3
  %s6 = scalar_select 0, %s5, %s3
  $region1: #{tpu_custom_call.1} parent=0
    #allocation2 [shape = 'u8[4096]{0}', space=vmem, size = 0x1000, scoped, tag = 'input window, operand 0, single buffered']
    #allocation3 [shape = 's32[1]{0}', space=sflag, size = 0x4, scoped, tag = 'scoped memory for tpu_custom_call.1']
    #allocation4 [shape = 's32[1]{0}', space=sflag, size = 0x4, scoped, tag = 'scoped memory for tpu_custom_call.1']
    #allocation5 [shape = 'u8[4096]{0}', space=vmem, size = 0x1000, scoped, tag = 'input window, operand 1, single buffered']
    #allocation6 [shape = 's32[1]{0}', space=sflag, size = 0x4, scoped, tag = 'scoped memory for tpu_custom_call.1']
    #allocation7 [shape = 'u8[4096]{0}', space=vmem, size = 0x1000, scoped, tag = 'output window, operand 0, single buffered']
    %7 = vsyncpa [#allocation3], 0
    %8 = vsyncpa [#allocation6], 0
    %9 = vsyncpa [#allocation4], 0
    // Predicated region
    $region2: #{tpu_custom_call.1} parent=1 // pred_check
      _
    $region3: #{tpu_custom_call.1} parent=1 // pred_check_branch
      %11 = sbr.rel (0) target = $region5
    $region4: #{tpu_custom_call.1} parent=1 // pred_region
      %13 = vsyncadd [#allocation3], 0
      %s15 = sshll.u32 %s0, 4
      %s16 = int_to_ptr.hbm [resolvable:$true] %s15
      %s17 = sshll.u32 [#allocation2], 4
      %s18 = int_to_ptr.vmem [resolvable:$true] %s17
      %20 = dma.hbm_to_vmem [thread:$0]  %s16, 128, %s18, [#allocation3]
    $region5: #{tpu_custom_call.1} parent=1 // pred_fallthru
      _
    // Predicated region
    $region6: #{tpu_custom_call.1} parent=1 // pred_check
      _
    $region7: #{tpu_custom_call.1} parent=1 // pred_check_branch
      %22 = sbr.rel (0) target = $region9
    $region8: #{tpu_custom_call.1} parent=1 // pred_region
      %24 = vsyncadd [#allocation6], 0
      %s26 = sshll.u32 %s1, 4
      %s27 = int_to_ptr.hbm [resolvable:$true] %s26
      %s28 = sshll.u32 [#allocation5], 4
      %s29 = int_to_ptr.vmem [resolvable:$true] %s28
      %31 = dma.hbm_to_vmem [thread:$0]  %s27, 128, %s29, [#allocation6]
    $region9: #{tpu_custom_call.1} parent=1 // pred_fallthru
      _
    // Predicated region
    $region10: #{tpu_custom_call.1} parent=1 // pred_check
      _
    $region11: #{tpu_custom_call.1} parent=1 // pred_check_branch
      %33 = sbr.rel (0) target = $region13
    $region12: #{tpu_custom_call.1} parent=1 // pred_region
      %35 = dma.done [#allocation3], 128
    $region13: #{tpu_custom_call.1} parent=1 // pred_fallthru
      _
    // Predicated region
    $region14: #{tpu_custom_call.1} parent=1 // pred_check
      _
    $region15: #{tpu_custom_call.1} parent=1 // pred_check_branch
      %37 = sbr.rel (0) target = $region17
    $region16: #{tpu_custom_call.1} parent=1 // pred_region
      %39 = dma.done [#allocation6], 128
    $region17: #{tpu_custom_call.1} parent=1 // pred_fallthru
      _
    %p40 = scmp.eq.s32.totalorder 0, 0
    // Predicated region
    $region18: #{tpu_custom_call.1} parent=1 // pred_check
      %p41 = pneg %p40
    $region19: #{tpu_custom_call.1} parent=1 // pred_check_branch
      %43 = sbr.rel (%p41) target = $region21
    $region20: #{tpu_custom_call.1} parent=1 // pred_region
      %44 = vst [vmem:[#allocation7] sm:$0xff] 0.0
    $region21: #{tpu_custom_call.1} parent=1 // pred_fallthru
      _
    %v45 = vld [vmem:[#allocation2] sm:$0xff]
    %v46 = vld [vmem:[#allocation5] sm:$0xff]
    %v47 = vand.u32 2147483647, %v45
    %v48 = vsub.f32 0.0, %v47
    %v49 = vmax.f32 %v45, 0.0
    %v50 = vmul.f32 %v45, %v46
    %v51 = vsub.f32 %v49, %v50
    %v52 = vmul.f32 %v48, 1.442695
    %v53 = vpow.pop %v52
    %v54 = vadd.f32 %v53, 1.0
    %v55 = vlog2.pop %v54
    %v56 = vmul.f32 %v55, 0.6931472
    %v57 = vmul.f32 -0.5, %v53
    %v58 = vadd.f32 %v57, 1.0
    %v59 = vmul.f32 %v58, %v53
    %v60 = vand.u32 2147483647, %v53
    %vm61 = vcmp.lt.f32.partialorder %v60, 0.0004427343
    %v62 = vsel %vm61, %v59, %v56
    %v63 = vadd.f32 %v51, %v62
    %s64 = sadd.s32 0, 0
    %s65 = smul.u32 %s64, 1024
    %v66 = vlaneseq
    %v67 = vshrl.u32 %v66, 7
    %v68 = vlaneseq
    %v69 = vand.u32 %v68, 127
    %v70 = vmul.u32 %v67, 128
    %v71 = vstv %s65
    %v72 = vadd.s32 %v71, %v70
    %v73 = vadd.s32 %v72, %v69
    %vm74 = vcmp.lt.s32.totalorder %v73, 128
    %v75 = vsel %vm74, %v63, 0.0
    %v76 = vld [vmem:[#allocation7] sm:$0xff]
    %v77 = vadd.f32 %v75, 0.0
    %v78 = vadd.f32 %v76, %v77
    %79 = vst [vmem:[#allocation7] sm:$0xff] %v78
    // Predicated region
    $region22: #{tpu_custom_call.1} parent=1 // pred_check
      _
    $region23: #{tpu_custom_call.1} parent=1 // pred_check_branch
      %81 = sbr.rel (0) target = $region25
    $region24: #{tpu_custom_call.1} parent=1 // pred_region
      %83 = vsyncadd [#allocation4], 0
      %s85 = sshll.u32 [#allocation7], 4
      %s86 = int_to_ptr.vmem [resolvable:$true] %s85
      %s87 = sshll.u32 %s2, 4
      %s88 = int_to_ptr.hbm [resolvable:$true] %s87
      %90 = dma.vmem_to_hbm [thread:$0]  %s86, 128, %s88, [#allocation4]
    $region25: #{tpu_custom_call.1} parent=1 // pred_fallthru
      _
    // Predicated region
    $region26: #{tpu_custom_call.1} parent=1 // pred_check
      _
    $region27: #{tpu_custom_call.1} parent=1 // pred_check_branch
      %92 = sbr.rel (0) target = $region29
    $region28: #{tpu_custom_call.1} parent=1 // pred_region
      %94 = dma.done [#allocation4], 128
    $region29: #{tpu_custom_call.1} parent=1 // pred_fallthru
      _
    %95 = vsyncpa [#allocation3], 1
    %96 = vsyncpa [#allocation6], 1
    %97 = vsyncpa [#allocation4], 1

</llo_original>
